<compile_context>
chip_gen: v7x
topology: tpu7x:2x2x1
jax: 0.10.0
libtpu: 0.0.40
codegen_flags: <defaults>
</compile_context>

<pallas_src>
import math
import functools

import jax
import jax.numpy as jnp
from jax import lax
from jax.experimental import pallas as pl
from jax.experimental.pallas import tpu as pltpu


def _device_kind() -> str:
    try:
        return jax.devices()[0].device_kind.lower()
    except Exception:  # pragma: no cover - defensive
        return ""


def _vmem_limit_bytes() -> int:
    # ~75% of physical VMEM, capped at 100 MiB (v5e/v6e: 128 MiB -> 96 MiB,
    # v7x: 64 MiB -> 48 MiB).  Conservative fallback if the query fails.
    try:
        cap = int(pltpu.get_tpu_info().vmem_capacity_bytes)
        return min((cap * 3) // 4, 100 * 1024 * 1024)
    except Exception:  # pragma: no cover - defensive
        return 48 * 1024 * 1024


_VMEM_LIMIT = _vmem_limit_bytes()


def _pick_tile(dim, candidates):
    """Largest candidate dividing `dim`; falls back to the full extent (still legal,
    since a full-extent block always satisfies the (8,128) rule)."""
    for c in candidates:
        if dim % c == 0:
            return c
    return dim


_TILE_CANDIDATES = (256, 128, 64, 32, 16, 8)


# ---------------------------------------------------------------------------
# 1) Fused QKV projection with head split done by the output index_map.
#    x (B, T, C) bf16  @  w3 (3, H, C, hd) bf16  + b3 (3, H, 1, hd) f32
#      -> qkv3 (3, B*H, T, hd) bf16
# ---------------------------------------------------------------------------
def _qkv_proj_kernel(x_ref, w_ref, b_ref, o_ref):
    acc = jnp.dot(x_ref[...], w_ref[...], preferred_element_type=jnp.float32)
    o_ref[...] = (acc + b_ref[...]).astype(o_ref.dtype)


def _qkv_projection(x_bf16, w3, b3, *, n_head, head_dim, tm):
    B, T, C = x_bf16.shape
    H, hd = n_head, head_dim
    return pl.pallas_call(
        _qkv_proj_kernel,
        out_shape=jax.ShapeDtypeStruct((3, B * H, T, hd), jnp.bfloat16),
        grid_spec=pltpu.PrefetchScalarGridSpec(
            num_scalar_prefetch=0,
            grid=(B, T // tm, 3, H),
            in_specs=[
                # x tile stays resident across the (s, h) inner axes -> read once.
                pl.BlockSpec((None, tm, C), lambda b, t, s, h: (b, t, 0)),
                # Per-head weight slab is streamed; nothing holds (C, 3C) in VMEM.
                pl.BlockSpec((None, None, C, hd), lambda b, t, s, h: (s, h, 0, 0)),
                pl.BlockSpec((None, None, 1, hd), lambda b, t, s, h: (s, h, 0, 0)),
            ],
            out_specs=pl.BlockSpec(
                (None, None, tm, hd),
                lambda b, t, s, h: (s, b * H + h, t, 0)),
        ),
        compiler_params=pltpu.CompilerParams(
            dimension_semantics=("parallel", "parallel", "parallel", "parallel"),
            vmem_limit_bytes=_VMEM_LIMIT),
    )(x_bf16, w3, b3)


# ---------------------------------------------------------------------------
# 2) Causal flash attention on the (3, B*H, T, hd) tensor.
#    Grid = (B*H, q_tiles, kv_tiles); kv is the innermost ("arbitrary") axis.
# ---------------------------------------------------------------------------
def _flash_attn_kernel(q_ref, k_ref, v_ref, o_ref, m_sc, l_sc, acc_sc,
                       *, scale, tq, tkv):
    qi = pl.program_id(1)
    ki = pl.program_id(2)

    q_first = qi * tq
    q_last = q_first + (tq - 1)
    k_first = ki * tkv
    k_last = k_first + (tkv - 1)

    @pl.when(ki == 0)
    def _init():
        m_sc[...] = jnp.full_like(m_sc, -jnp.inf)
        l_sc[...] = jnp.zeros_like(l_sc)
        acc_sc[...] = jnp.zeros_like(acc_sc)

    def _update(masked):
        # Fold the softmax scale into q: (tq, hd) multiply instead of (tq, tkv).
        q = (q_ref[...].astype(jnp.float32) * scale).astype(jnp.bfloat16)
        k = k_ref[...]
        v = v_ref[...]
        # Contract dim 1 of both q and k -> no explicit transpose of the k tile.
        s = lax.dot_general(q, k, (((1,), (1,)), ((), ())),
                            preferred_element_type=jnp.float32)      # (tq, tkv)
        if masked:
            row = q_first + lax.broadcasted_iota(jnp.int32, (tq, 1), 0)
            col = k_first + lax.broadcasted_iota(jnp.int32, (1, tkv), 1)
            keep = row >= col                                        # broadcast
            s = jnp.where(keep, s, -1e30)
        m_prev = m_sc[...]
        m_new = jnp.maximum(m_prev, jnp.max(s, axis=-1, keepdims=True))
        alpha = jnp.exp(m_prev - m_new)
        p = jnp.exp(s - m_new)
        if masked:
            # Guard: a fully-masked row (possible when tq != tkv) must not
            # contribute exp(0)=1 terms to l / acc.
            p = jnp.where(keep, p, 0.0)
        l_sc[...] = alpha * l_sc[...] + jnp.sum(p, axis=-1, keepdims=True)
        acc_sc[...] = alpha * acc_sc[...] + jnp.dot(
            p.astype(jnp.bfloat16), v, preferred_element_type=jnp.float32)
        m_sc[...] = m_new

    # Diagonal (boundary) tiles: build the causal mask.
    @pl.when(jnp.logical_and(k_first <= q_last, k_last > q_first))
    def _diag():
        _update(masked=True)

    # Tiles fully below the diagonal: no mask / iota / where at all.
    @pl.when(k_last <= q_first)
    def _full():
        _update(masked=False)

    # Tiles fully above the diagonal fall through: no compute, and the clamped
    # k/v index_map means no DMA was issued for them either.

    @pl.when(ki == pl.num_programs(2) - 1)
    def _finalize():
        inv = pl.reciprocal(l_sc[...], approx=True)      # EUP slot, ~free
        o_ref[...] = (acc_sc[...] * inv).astype(o_ref.dtype)


def _flash_attention(qkv3, *, scale, tq, tkv, out_dtype):
    _, N, T, hd = qkv3.shape
    kernel = functools.partial(_flash_attn_kernel, scale=scale, tq=tq, tkv=tkv)

    def _kv_last(qi):
        # Last kv tile that is causally visible to any row of q tile `qi`.
        return (qi * tq + (tq - 1)) // tkv

    q_map = lambda n, qi, ki: (0, n, qi, 0)
    # Clamp: causally-skipped steps revisit the resident block -> no DMA.
    k_map = lambda n, qi, ki: (1, n, jnp.minimum(ki, _kv_last(qi)), 0)
    v_map = lambda n, qi, ki: (2, n, jnp.minimum(ki, _kv_last(qi)), 0)

    return pl.pallas_call(
        kernel,
        out_shape=jax.ShapeDtypeStruct((N, T, hd), out_dtype),
        grid_spec=pltpu.PrefetchScalarGridSpec(
            num_scalar_prefetch=0,
            grid=(N, T // tq, T // tkv),
            in_specs=[
                pl.BlockSpec((None, None, tq, hd), q_map),
                pl.BlockSpec((None, None, tkv, hd), k_map),
                pl.BlockSpec((None, None, tkv, hd), v_map),
            ],
            out_specs=pl.BlockSpec((None, tq, hd), lambda n, qi, ki: (n, qi, 0)),
            scratch_shapes=[
                pltpu.VMEM((tq, 1), jnp.float32),    # running max m
                pltpu.VMEM((tq, 1), jnp.float32),    # running denom l
                pltpu.VMEM((tq, hd), jnp.float32),   # output accumulator
            ],
        ),
        compiler_params=pltpu.CompilerParams(
            dimension_semantics=("parallel", "parallel", "arbitrary"),
            vmem_limit_bytes=_VMEM_LIMIT),
    )(qkv3, qkv3, qkv3)
    # TODO(synk): for hd < 128 (e.g. 64), pair two heads per grid step so stores
    # are lane-dense and the p@v matmul fills the 256-wide MXU on v6e/v7x.


# ---------------------------------------------------------------------------
# 3) Output projection as a reduction over heads; reads the (B*H, T, hd)
#    attention output directly (no merge transpose).
#    out[b, t, :] = sum_h y[b*H+h, t, :] @ Wp[h] + bias
# ---------------------------------------------------------------------------
def _out_proj_kernel(y_ref, w_ref, b_ref, o_ref, acc_ref):
    h = pl.program_id(2)

    @pl.when(h == 0)
    def _init():
        acc_ref[...] = jnp.zeros_like(acc_ref)

    acc_ref[...] += jnp.dot(y_ref[...], w_ref[...],
                            preferred_element_type=jnp.float32)

    @pl.when(h == pl.num_programs(2) - 1)
    def _finalize():
        o_ref[...] = (acc_ref[...] + b_ref[...]).astype(o_ref.dtype)


def _out_projection(y, wp3, bp2, *, n_head, head_dim, tm, out_dtype):
    N, T, hd = y.shape
    H = n_head
    B = N // H
    C = H * hd
    return pl.pallas_call(
        _out_proj_kernel,
        out_shape=jax.ShapeDtypeStruct((B, T, C), out_dtype),
        grid_spec=pltpu.PrefetchScalarGridSpec(
            num_scalar_prefetch=0,
            grid=(B, T // tm, H),
            in_specs=[
                pl.BlockSpec((None, tm, hd), lambda b, t, h: (b * H + h, t, 0)),
                pl.BlockSpec((None, hd, C), lambda b, t, h: (h, 0, 0)),
                pl.BlockSpec((1, C), lambda b, t, h: (0, 0)),
            ],
            out_specs=pl.BlockSpec((None, tm, C), lambda b, t, h: (b, t, 0)),
            scratch_shapes=[pltpu.VMEM((tm, C), jnp.float32)],
        ),
        compiler_params=pltpu.CompilerParams(
            dimension_semantics=("parallel", "parallel", "arbitrary"),
            vmem_limit_bytes=_VMEM_LIMIT),
    )(y, wp3, bp2)


# ---------------------------------------------------------------------------
# Full forward pass = PyTorch CausalSelfAttention.forward
# ---------------------------------------------------------------------------
def causal_self_attention(x, w_attn, b_attn, w_proj, b_proj, *, n_head):
    """x: (B, T, C). w_attn: (C, 3C), b_attn: (3C,), w_proj: (C, C), b_proj: (C,).
    Weights are the PyTorch Linear weights pre-transposed to (in, out)."""
    B, T, C = x.shape
    assert C % n_head == 0
    H = n_head
    hd = C // H
    scale = 1.0 / math.sqrt(hd)

    # Generation-aware tiling: v5-class chips (4x128^2 MXU, no bf16 VPU) prefer
    # tkv=128; v6e/v7x (2x256^2 MXU) prefer 256.  tq/tm capped at 256 to keep the
    # f32 score/p intermediates well under the vreg file.
    kind = _device_kind()
    tkv_target = 128 if "v5" in kind else 256
    tq = _pick_tile(T, _TILE_CANDIDATES)
    tkv = _pick_tile(T, tuple(c for c in _TILE_CANDIDATES if c <= tkv_target))
    tm = _pick_tile(T, _TILE_CANDIDATES)

    # Parameter prep (weight-only, cheap vs. activation traffic):
    #   c_attn weight (C, 3C) -> (3, H, C, hd); bias (3C,) -> (3, H, 1, hd)
    #   c_proj weight (C, C)  -> (H, hd, C) (pure reshape); bias -> (1, C)
    w3 = w_attn.reshape(C, 3, H, hd).transpose(1, 2, 0, 3).astype(jnp.bfloat16)
    b3 = b_attn.reshape(3, H, 1, hd).astype(jnp.float32)
    wp3 = w_proj.reshape(H, hd, C).astype(jnp.bfloat16)
    bp2 = b_proj.reshape(1, C).astype(jnp.float32)

    # 1) QKV projection; heads split by the output index_map (no XLA transposes).
    x_bf = x.astype(jnp.bfloat16)          # halve activation DMA; f32 accumulation inside
    qkv3 = _qkv_projection(x_bf, w3, b3, n_head=H, head_dim=hd, tm=tm)

    # 2) Causal flash attention straight on the (3, B*H, T, hd) tensor.
    y = _flash_attention(qkv3, scale=scale, tq=tq, tkv=tkv, out_dtype=jnp.bfloat16)

    # 3) Output projection with head reduction (no merge transpose).
    return _out_projection(y, wp3, bp2, n_head=H, head_dim=hd, tm=tm,
                           out_dtype=x.dtype)


def _reference(x, w_attn, b_attn, w_proj, b_proj, n_head):
    """Plain-JAX f32 reference mirroring the PyTorch forward."""
    B, T, C = x.shape
    hd = C // n_head
    qkv = x @ w_attn + b_attn
    q, k, v = jnp.split(qkv, 3, axis=-1)

    def heads(t):
        return t.reshape(B, T, n_head, hd).transpose(0, 2, 1, 3)

    q, k, v = heads(q), heads(k), heads(v)
    s = jnp.einsum("bhqd,bhkd->bhqk", q, k) / math.sqrt(hd)
    mask = jnp.tril(jnp.ones((T, T), dtype=bool))
    s = jnp.where(mask, s, -1e30)
    p = jax.nn.softmax(s, axis=-1)
    y = jnp.einsum("bhqk,bhkd->bhqd", p, v)
    y = y.transpose(0, 2, 1, 3).reshape(B, T, C)
    return y @ w_proj + b_proj


if __name__ == "__main__":
    # Small config consistent with the module: n_embd % n_head == 0.
    B, T, C, n_head = 2, 8, 32, 4

    key = jax.random.PRNGKey(0)
    k_x, k_wa, k_ba, k_wp, k_bp = jax.random.split(key, 5)

    x = jax.random.normal(k_x, (B, T, C), dtype=jnp.float32)

    # nn.Linear(n_embd, 3*n_embd): torch weight (3C, C); stored transposed (C, 3C).
    w_attn = jax.random.normal(k_wa, (C, 3 * C), dtype=jnp.float32) * 0.02
    b_attn = jax.random.normal(k_ba, (3 * C,), dtype=jnp.float32) * 0.02
    # nn.Linear(n_embd, n_embd): stored transposed (C, C).
    w_proj = jax.random.normal(k_wp, (C, C), dtype=jnp.float32) * 0.02
    b_proj = jax.random.normal(k_bp, (C,), dtype=jnp.float32) * 0.02

    out = causal_self_attention(x, w_attn, b_attn, w_proj, b_proj, n_head=n_head)
    out = jax.block_until_ready(out)

    ref = _reference(x, w_attn, b_attn, w_proj, b_proj, n_head)
    assert out.shape == (B, T, C)
    # bf16 MXU operands vs pure-f32 reference -> loosened tolerance.
    assert jnp.allclose(out, ref, atol=2e-2, rtol=2e-2), (
        f"mismatch vs reference, max abs err = {jnp.max(jnp.abs(out - ref))}")

    print("KERNEL_OK")
</pallas_src>

<mosaic_0001>
module attributes {stable_mosaic.version = 11 : i64} {
  func.func @_qkv_proj_kernel(%arg0: i32, %arg1: i32, %arg2: i32, %arg3: i32, %arg4: memref<1x8x32xbf16, #tpu.memory_space<vmem>>, %arg5: memref<1x1x32x8xbf16, #tpu.memory_space<vmem>>, %arg6: memref<1x1x1x8xf32, #tpu.memory_space<vmem>>, %arg7: memref<1x1x8x8xbf16, #tpu.memory_space<vmem>>) attributes {dimension_semantics = [#tpu.dimension_semantics<parallel>, #tpu.dimension_semantics<parallel>, #tpu.dimension_semantics<parallel>, #tpu.dimension_semantics<parallel>], iteration_bounds = array<i64: 2, 1, 3, 4>, scalar_prefetch = 0 : i64, scratch_operands = 0 : i64, tpu.core_type = #tpu.core_type<tc>, window_params = [{transform_indices = @transform_0, window_bounds = array<i64: 1, 8, 32>}, {transform_indices = @transform_1, window_bounds = array<i64: 1, 1, 32, 8>}, {transform_indices = @transform_2, window_bounds = array<i64: 1, 1, 1, 8>}, {transform_indices = @transform_3, window_bounds = array<i64: 1, 1, 8, 8>}]} {
    %c0 = arith.constant 0 : index
    %c0_0 = arith.constant 0 : index
    %c0_1 = arith.constant 0 : index
    %0 = vector.load %arg4[%c0, %c0_0, %c0_1] : memref<1x8x32xbf16, #tpu.memory_space<vmem>>, vector<1x8x32xbf16>
    %1 = vector.shape_cast %0 : vector<1x8x32xbf16> to vector<8x32xbf16>
    %c0_2 = arith.constant 0 : index
    %c0_3 = arith.constant 0 : index
    %c0_4 = arith.constant 0 : index
    %c0_5 = arith.constant 0 : index
    %2 = vector.load %arg5[%c0_2, %c0_3, %c0_4, %c0_5] : memref<1x1x32x8xbf16, #tpu.memory_space<vmem>>, vector<1x1x32x8xbf16>
    %3 = vector.shape_cast %2 : vector<1x1x32x8xbf16> to vector<32x8xbf16>
    %cst = arith.constant dense<0.000000e+00> : vector<8x8xf32>
    %4 = tpu.matmul %1, %3, %cst {dimension_numbers = #tpu.dot_dimension_numbers<[1], [0], [0], [1], [0, 0, 1, 1], [], []>} : vector<8x32xbf16>, vector<32x8xbf16>, vector<8x8xf32> -> vector<8x8xf32>
    %c0_6 = arith.constant 0 : index
    %c0_7 = arith.constant 0 : index
    %c0_8 = arith.constant 0 : index
    %c0_9 = arith.constant 0 : index
    %5 = vector.load %arg6[%c0_6, %c0_7, %c0_8, %c0_9] : memref<1x1x1x8xf32, #tpu.memory_space<vmem>>, vector<1x1x1x8xf32>
    %6 = vector.shape_cast %5 : vector<1x1x1x8xf32> to vector<1x8xf32>
    %7 = vector.broadcast %6 : vector<1x8xf32> to vector<8x8xf32>
    %8 = arith.addf %4, %7 : vector<8x8xf32>
    %9 = arith.truncf %8 : vector<8x8xf32> to vector<8x8xbf16>
    %c0_10 = arith.constant 0 : index
    %c0_11 = arith.constant 0 : index
    %c0_12 = arith.constant 0 : index
    %c0_13 = arith.constant 0 : index
    %10 = vector.load %arg7[%c0_10, %c0_11, %c0_12, %c0_13] : memref<1x1x8x8xbf16, #tpu.memory_space<vmem>>, vector<1x1x8x8xbf16>
    %11 = vector.shape_cast %10 : vector<1x1x8x8xbf16> to vector<8x8xbf16>
    %12 = vector.shape_cast %9 : vector<8x8xbf16> to vector<1x1x8x8xbf16>
    tpu.vector_store %arg7[%c0_10, %c0_11, %c0_12, %c0_13], %12 {strides = array<i32>} : memref<1x1x8x8xbf16, #tpu.memory_space<vmem>>, vector<1x1x8x8xbf16>,
    return
  }
  func.func @transform_0(%arg0: i32, %arg1: i32, %arg2: i32, %arg3: i32) -> (i32, i32, i32) {
    %c0_i32 = arith.constant 0 : i32
    %c0_i32_0 = arith.constant 0 : i32
    return %arg0, %arg1, %c0_i32 : i32, i32, i32
  }
  func.func @transform_1(%arg0: i32, %arg1: i32, %arg2: i32, %arg3: i32) -> (i32, i32, i32, i32) {
    %c0_i32 = arith.constant 0 : i32
    %c0_i32_0 = arith.constant 0 : i32
    %c0_i32_1 = arith.constant 0 : i32
    return %arg2, %arg3, %c0_i32, %c0_i32_0 : i32, i32, i32, i32
  }
  func.func @transform_2(%arg0: i32, %arg1: i32, %arg2: i32, %arg3: i32) -> (i32, i32, i32, i32) {
    %c0_i32 = arith.constant 0 : i32
    %c0_i32_0 = arith.constant 0 : i32
    %c0_i32_1 = arith.constant 0 : i32
    return %arg2, %arg3, %c0_i32, %c0_i32_0 : i32, i32, i32, i32
  }
  func.func @transform_3(%arg0: i32, %arg1: i32, %arg2: i32, %arg3: i32) -> (i32, i32, i32, i32) {
    %c4_i32 = arith.constant 4 : i32
    %0 = arith.muli %arg0, %c4_i32 : i32
    %1 = arith.addi %0, %arg3 : i32
    %c0_i32 = arith.constant 0 : i32
    %c0_i32_0 = arith.constant 0 : i32
    return %arg2, %1, %arg1, %c0_i32 : i32, i32, i32, i32
  }
}

</mosaic_0001>

<llo_original>
// kernel: tpu_custom_call.1
$region0: #{tpu_custom_call.1}
  #allocation0 [shape = 'u32[]', space=smem, size = 0x4, offset = 0x4, fixed_abs, tag = 'smem constant byte address 0x4 - core index']
  #allocation1 [shape = 'u32[144,128]{1,0:T(1,128)}', space=vmem, size = 0x12000, scoped, tag = 'internal scratch']
  %s0 = inlined_call_operand.vmem [shape: bf16[2,8,32], index: 0, kind: input, shape index: {}]
  %s1 = inlined_call_operand.vmem [shape: bf16[3,4,32,8], index: 1, kind: input, shape index: {}]
  %s2 = inlined_call_operand.vmem [shape: f32[3,4,1,8], index: 2, kind: input, shape index: {}]
  %s3 = inlined_call_operand.hbm [shape: bf16[3,8,8,8], index: 3, kind: output, shape index: {}]
  %s4 = sld [smem:[#allocation0]]
  $region45: #{tpu_custom_call.1} parent=0
    _
  %s6 = ssub.s32 1, %s4
  %s7 = scalar_select 0, %s6, %s4
  $region1: #{tpu_custom_call.1} parent=0
    #allocation2 [shape = 'u8[4096]{0}', space=vmem, size = 0x1000, scoped, tag = 'output window, operand 0']
    #allocation3 [shape = 's32[2]{0}', space=sflag, size = 0x8, scoped, tag = 'scoped memory for tpu_custom_call.1']
    %8 = vsyncpa [#allocation3], 0
    %s9 = scalar_lea.sflag [#allocation3], 1
    %10 = vsyncpa %s9, 0
    loop: start=0, step=1, limit=26
    $region2: #{tpu_custom_call.1} parent=1 // loop_pre_header
      _
    $region3: #{tpu_custom_call.1} parent=1 // loop_header
      %s12 = sphi 0, %s16
      %p13 = scmp.ge.s32.totalorder %s12, 26
      %s19 = sphi 0, %s45
      %s20 = sphi 0, %s41
      %s21 = sphi 0, %s37
      %s22 = sphi 0, %s33
      %s23 = sphi 0, %s19
      %s24 = sphi 0, %s20
      %s25 = sphi 0, %s21
      %s26 = sphi 0, %s22
      %s27 = sphi 0, %s23
      %s28 = sphi 0, %s24
      %s29 = sphi 0, %s25
      %s30 = sphi 0, %s26
      %s50 = sphi 0, %s52
      %s53 = sphi 0, %s50
      %s54 = sphi 0, %s53
      %s70 = sphi 0, %s54
      %s78 = sphi 0, %s80
      %s81 = sphi 0, %s78
      %s82 = sphi 0, %s81
      %s98 = sphi 0, %s82
      %s106 = sphi 0, %s108
      %s109 = sphi 0, %s106
      %s110 = sphi 0, %s109
      %s126 = sphi 0, %s110
      %s140 = sphi 0, %s142
      %s143 = sphi 0, %s140
      %s144 = sphi 0, %s143
      %s160 = sphi 0, %s144
    $region4: #{tpu_custom_call.1} parent=1 // loop_header_branch
      %15 = sbr.rel (%p13) target = $region8
    $region5: #{tpu_custom_call.1} parent=1 // loop_body
      %s17 = ssub.s32 %s12, 1
      %s18 = ssub.s32 %s12, 2
      %s31 = sadd.s32 1, %s22
      %p32 = scmp.ge.s32.totalorder %s31, 4
      %s33 = scalar_select %p32, 0, %s31
      %s34 = sadd.s32 1, %s21
      %s35 = scalar_select %p32, %s34, %s21
      %p36 = scmp.ge.s32.totalorder %s35, 3
      %s37 = scalar_select %p36, 0, %s35
      %s38 = sadd.s32 1, %s20
      %s39 = scalar_select %p36, %s38, %s20
      %p40 = scmp.ge.s32.totalorder %s39, 1
      %s41 = scalar_select %p40, 0, %s39
      %s42 = sadd.s32 1, %s19
      %s43 = scalar_select %p40, %s42, %s19
      %p44 = scmp.ge.s32.totalorder %s43, 2
      %s45 = scalar_select %p44, 0, %s43
      %s46 = ssub.s32 %s19, %s45
      %s47 = ssub.s32 %s20, %s41
      %s48 = sor.u32 %s46, %s47
      %p49 = scmp.eq.s32.totalorder %s48, 0
      %s51 = sadd.s32 %s50, 1
      %s52 = scalar_select %p49, %s50, %s51
      %p55 = pneg %p49
      %p56 = scmp.eq.s32.totalorder %s12, 23
      %p57 = por %p55, %p56
      %p58 = scmp.ne.s32.totalorder %s50, %s53
      %p59 = scmp.eq.s32.totalorder %s12, 0
      %p60 = por %p58, %p59
      %p61 = scmp.ne.s32.totalorder %s50, %s53
      %p62 = scmp.eq.s32.totalorder %s17, 23
      %p63 = por %p61, %p62
      %p64 = scmp.ne.s32.totalorder %s53, %s54
      %p65 = scmp.eq.s32.totalorder %s17, 0
      %p66 = por %p64, %p65
      %p67 = scmp.ne.s32.totalorder %s53, %s54
      %p68 = scmp.eq.s32.totalorder %s18, 23
      %p69 = por %p67, %p68
      %p71 = scmp.ne.s32.totalorder %s54, %s70
      %p72 = scmp.eq.s32.totalorder %s18, 0
      %p73 = por %p71, %p72
      %s74 = ssub.s32 %s21, %s37
      %s75 = ssub.s32 %s22, %s33
      %s76 = sor.u32 %s74, %s75
      %p77 = scmp.eq.s32.totalorder %s76, 0
      %s79 = sadd.s32 %s78, 1
      %s80 = scalar_select %p77, %s78, %s79
      %p83 = pneg %p77
      %p84 = scmp.eq.s32.totalorder %s12, 23
      %p85 = por %p83, %p84
      %p86 = scmp.ne.s32.totalorder %s78, %s81
      %p87 = scmp.eq.s32.totalorder %s12, 0
      %p88 = por %p86, %p87
      %p89 = scmp.ne.s32.totalorder %s78, %s81
      %p90 = scmp.eq.s32.totalorder %s17, 23
      %p91 = por %p89, %p90
      %p92 = scmp.ne.s32.totalorder %s81, %s82
      %p93 = scmp.eq.s32.totalorder %s17, 0
      %p94 = por %p92, %p93
      %p95 = scmp.ne.s32.totalorder %s81, %s82
      %p96 = scmp.eq.s32.totalorder %s18, 23
      %p97 = por %p95, %p96
      %p99 = scmp.ne.s32.totalorder %s82, %s98
      %p100 = scmp.eq.s32.totalorder %s18, 0
      %p101 = por %p99, %p100
      %s102 = ssub.s32 %s21, %s37
      %s103 = ssub.s32 %s22, %s33
      %s104 = sor.u32 %s102, %s103
      %p105 = scmp.eq.s32.totalorder %s104, 0
      %s107 = sadd.s32 %s106, 1
      %s108 = scalar_select %p105, %s106, %s107
      %p111 = pneg %p105
      %p112 = scmp.eq.s32.totalorder %s12, 23
      %p113 = por %p111, %p112
      %p114 = scmp.ne.s32.totalorder %s106, %s109
      %p115 = scmp.eq.s32.totalorder %s12, 0
      %p116 = por %p114, %p115
      %p117 = scmp.ne.s32.totalorder %s106, %s109
      %p118 = scmp.eq.s32.totalorder %s17, 23
      %p119 = por %p117, %p118
      %p120 = scmp.ne.s32.totalorder %s109, %s110
      %p121 = scmp.eq.s32.totalorder %s17, 0
      %p122 = por %p120, %p121
      %p123 = scmp.ne.s32.totalorder %s109, %s110
      %p124 = scmp.eq.s32.totalorder %s18, 23
      %p125 = por %p123, %p124
      %p127 = scmp.ne.s32.totalorder %s110, %s126
      %p128 = scmp.eq.s32.totalorder %s18, 0
      %p129 = por %p127, %p128
      %s130 = smul.u32 %s19, 4
      %s131 = sadd.s32 %s130, %s22
      %s132 = smul.u32 %s45, 4
      %s133 = sadd.s32 %s132, %s33
      %s134 = ssub.s32 %s21, %s37
      %s135 = ssub.s32 %s131, %s133
      %s136 = sor.u32 %s134, %s135
      %s137 = ssub.s32 %s20, %s41
      %s138 = sor.u32 %s136, %s137
      %p139 = scmp.eq.s32.totalorder %s138, 0
      %s141 = sadd.s32 %s140, 1
      %s142 = scalar_select %p139, %s140, %s141
      %p145 = pneg %p139
      %p146 = scmp.eq.s32.totalorder %s12, 23
      %p147 = por %p145, %p146
      %p148 = scmp.ne.s32.totalorder %s140, %s143
      %p149 = scmp.eq.s32.totalorder %s12, 0
      %p150 = por %p148, %p149
      %p151 = scmp.ne.s32.totalorder %s140, %s143
      %p152 = scmp.eq.s32.totalorder %s17, 23
      %p153 = por %p151, %p152
      %p154 = scmp.ne.s32.totalorder %s143, %s144
      %p155 = scmp.eq.s32.totalorder %s17, 0
      %p156 = por %p154, %p155
      %p157 = scmp.ne.s32.totalorder %s143, %s144
      %p158 = scmp.eq.s32.totalorder %s18, 23
      %p159 = por %p157, %p158
      %p161 = scmp.ne.s32.totalorder %s144, %s160
      %p162 = scmp.eq.s32.totalorder %s18, 0
      %p163 = por %p161, %p162
      %p164 = scmp.le.s32.totalorder 1, %s12
      %p165 = scmp.lt.s32.totalorder %s12, 25
      %p166 = pnand %p164, %p165
      %p167 = pneg %p166
      // Predicated region
      $region9: #{tpu_custom_call.1} parent=5 // pred_check
        _
      $region10: #{tpu_custom_call.1} parent=5 // pred_check_branch
        %169 = sbr.rel (%p166) target = $region12
      $region11: #{tpu_custom_call.1} parent=5 // pred_region
        %s170 = ssub.s32 %s12, 1
      $region12: #{tpu_custom_call.1} parent=5 // pred_fallthru
        _
      %p171 = scmp.lt.s32.totalorder %s12, 24
      // Predicated region
      $region13: #{tpu_custom_call.1} parent=5 // pred_check
        %p172 = pneg %p171
      $region14: #{tpu_custom_call.1} parent=5 // pred_check_branch
        %174 = sbr.rel (%p172) target = $region16
      $region15: #{tpu_custom_call.1} parent=5 // pred_region
        // Predicated region
        $region17: #{tpu_custom_call.1} parent=15 // pred_check
          %p175 = pneg %p60
        $region18: #{tpu_custom_call.1} parent=15 // pred_check_branch
          %177 = sbr.rel (%p175) target = $region20
        $region19: #{tpu_custom_call.1} parent=15 // pred_region
          %p178 = scmp.lt.s32.totalorder %s19, 1
          %s179 = scalar_select %p178, %s19, 1
          %p180 = scmp.lt.s32.totalorder %s20, 0
          %s181 = scalar_select %p180, %s20, 0
          %s182 = sadd.s32 %s181, %s179
          %s183 = smul.addr %s182, 4
          %s184 = scalar_lea.vmem %s0, %s183
        $region20: #{tpu_custom_call.1} parent=15 // pred_fallthru
          _
        // Predicated region
        $region21: #{tpu_custom_call.1} parent=15 // pred_check
          %p185 = pneg %p88
        $region22: #{tpu_custom_call.1} parent=15 // pred_check_branch
          %187 = sbr.rel (%p185) target = $region24
        $region23: #{tpu_custom_call.1} parent=15 // pred_region
          %p188 = scmp.lt.s32.totalorder %s21, 2
          %s189 = scalar_select %p188, %s21, 2
          %p190 = scmp.lt.s32.totalorder %s22, 3
          %s191 = scalar_select %p190, %s22, 3
          %s192 = smul.addr %s191, 4
          %s193 = smul.addr %s189, 16
          %s194 = sadd.s32 %s192, %s193
          %s195 = smul.addr %s194, 4
          %s196 = scalar_lea.vmem %s1, %s195
        $region24: #{tpu_custom_call.1} parent=15 // pred_fallthru
          _
        // Predicated region
        $region25: #{tpu_custom_call.1} parent=15 // pred_check
          %p197 = pneg %p116
        $region26: #{tpu_custom_call.1} parent=15 // pred_check_branch
          %199 = sbr.rel (%p197) target = $region28
        $region27: #{tpu_custom_call.1} parent=15 // pred_region
          %p200 = scmp.lt.s32.totalorder %s21, 2
          %s201 = scalar_select %p200, %s21, 2
          %p202 = scmp.lt.s32.totalorder %s22, 3
          %s203 = scalar_select %p202, %s22, 3
          %s204 = smul.addr %s201, 4
          %s205 = sadd.s32 %s203, %s204
          %s206 = scalar_lea.vmem %s2, %s205
        $region28: #{tpu_custom_call.1} parent=15 // pred_fallthru
          _
      $region16: #{tpu_custom_call.1} parent=5 // pred_fallthru
        _
      %p207 = scmp.le.s32.totalorder 1, %s12
      %p208 = scmp.lt.s32.totalorder %s12, 25
      %p209 = pnand %p207, %p208
      %p210 = pneg %p209
      // Predicated region
      $region29: #{tpu_custom_call.1} parent=5 // pred_check
        _
      $region30: #{tpu_custom_call.1} parent=5 // pred_check_branch
        %212 = sbr.rel (%p209) target = $region32
      $region31: #{tpu_custom_call.1} parent=5 // pred_region
        %s213 = ssub.s32 %s12, 1
        %p214 = scmp.lt.s32.totalorder %s23, 1
        %s215 = scalar_select %p214, %s23, 1
        %p216 = scmp.lt.s32.totalorder %s24, 0
        %s217 = scalar_select %p216, %s24, 0
        %s218 = sadd.s32 %s217, %s215
        %s219 = smul.addr %s218, 4
        %s220 = scalar_lea.vmem %s0, %s219
        %p221 = pneg %p66
        %p222 = pneg %p63
        %p223 = scmp.lt.s32.totalorder %s25, 2
        %s224 = scalar_select %p223, %s25, 2
        %p225 = scmp.lt.s32.totalorder %s26, 3
        %s226 = scalar_select %p225, %s26, 3
        %s227 = smul.addr %s226, 4
        %s228 = smul.addr %s224, 16
        %s229 = sadd.s32 %s227, %s228
        %s230 = smul.addr %s229, 4
        %s231 = scalar_lea.vmem %s1, %s230
        %p232 = pneg %p94
        %p233 = pneg %p91
        %p234 = scmp.lt.s32.totalorder %s25, 2
        %s235 = scalar_select %p234, %s25, 2
        %p236 = scmp.lt.s32.totalorder %s26, 3
        %s237 = scalar_select %p236, %s26, 3
        %s238 = smul.addr %s235, 4
        %s239 = sadd.s32 %s237, %s238
        %s240 = scalar_lea.vmem %s2, %s239
        %p241 = pneg %p122
        %p242 = pneg %p119
        %p243 = pneg %p156
        %p244 = pneg %p153
        %s245 = sand.u32 %s143, 1
        %s246 = scalar_lea.sflag [#allocation3], %s245
        %s247 = sand.u32 %s143, 1
        %s248 = smul.addr %s247, 4
        %s249 = scalar_lea.vmem [#allocation2], %s248
        %p250 = scmp.lt.s32.totalorder %s23, 1
        %s251 = scalar_select %p250, %s23, 1
        %p252 = scmp.lt.s32.totalorder %s24, 0
        %s253 = scalar_select %p252, %s24, 0
        %s254 = sadd.s32 %s253, %s251
        %s255 = smul.addr %s254, 4
        %s256 = scalar_lea.vmem %s0, %s255
        %p257 = scmp.lt.s32.totalorder %s25, 2
        %s258 = scalar_select %p257, %s25, 2
        %p259 = scmp.lt.s32.totalorder %s26, 3
        %s260 = scalar_select %p259, %s26, 3
        %s261 = smul.addr %s260, 4
        %s262 = smul.addr %s258, 16
        %s263 = sadd.s32 %s261, %s262
        %s264 = smul.addr %s263, 4
        %s265 = scalar_lea.vmem %s1, %s264
        %p266 = scmp.lt.s32.totalorder %s25, 2
        %s267 = scalar_select %p266, %s25, 2
        %p268 = scmp.lt.s32.totalorder %s26, 3
        %s269 = scalar_select %p268, %s26, 3
        %s270 = smul.addr %s267, 4
        %s271 = sadd.s32 %s269, %s270
        %s272 = scalar_lea.vmem %s2, %s271
        %s273 = smul.u32 %s23, 4
        %s274 = sadd.s32 %s273, %s26
        %v276 = vld [vmem:[%s256] sm:$0xf]
        %v277 = vld [vmem:[%s265] sm:$0xf]
        %v278 = vld [vmem:[%s265 + $0x4] sm:$0xf]
        %v279 = vld [vmem:[%s265 + $0x8] sm:$0xf]
        %v280 = vld [vmem:[%s265 + $0xc] sm:$0xf]
        %v281 = vld [vmem:[%s272] sm:$0x1]
        %v283 = vlaneseq
        %v284 = vshrl.u32 %v283, 7
        %v285 = vsub.s32 0, %v284
        %v286 = vrot.slane %v281, %v285
        %v292 = vunpack.c.l.b16 %v277
        %v293 = vunpack.c.l.b16 %v278
        %v294 = vunpack.c.l.b16 %v279
        %v295 = vunpack.c.l.b16 %v280
        %v296 = vpack.c.b16 %v293, %v292
        %v297 = vpack.c.b16 %v295, %v294
        %vm300 = vcmask 261120
        %v302 = vsel %vm300, %v276, 0
        %304 = vmatprep.subr.bf16.mxu0 0
        %305 = vmatpush1.bf16.msra.mxu0 %v296
        %306 = vmatprep.subr.bf16.mxu0 0
        %307 = vmatpush1.bf16.msra.mxu0 %v297
        %308 = vmatprep.subr.bf16.mxu0 0
        %309 = vmatpush1.bf16.msra.mxu0 0
        %310 = vmatprep.subr.bf16.mxu0 0
        %311 = vmatpush1.bf16.msra.mxu0 0
        %312 = vmatprep.subr.bf16.mxu0 0
        %313 = vmatpush1.bf16.msra.mxu0 0
        %314 = vmatprep.subr.bf16.mxu0 0
        %315 = vmatpush1.bf16.msra.mxu0 0
        %316 = vmatprep.subr.bf16.mxu0 0
        %317 = vmatpush1.bf16.msra.mxu0 0
        %318 = vmatprep.subr.bf16.mxu0 0
        %319 = vmatpush1.bf16.msra.mxu0 0
        %320 = vmatprep.subr.bf16.mxu0 0
        %321 = vmatpush1.bf16.msra.mxu0 0
        %322 = vmatprep.subr.bf16.mxu0 0
        %323 = vmatpush1.bf16.msra.mxu0 0
        %324 = vmatprep.subr.bf16.mxu0 0
        %325 = vmatpush1.bf16.msra.mxu0 0
        %326 = vmatprep.subr.bf16.mxu0 0
        %327 = vmatpush1.bf16.msra.mxu0 0
        %328 = vmatprep.subr.bf16.mxu0 0
        %329 = vmatpush1.bf16.msra.mxu0 0
        %330 = vmatprep.subr.bf16.mxu0 0
        %331 = vmatpush1.bf16.msra.mxu0 0
        %332 = vmatprep.subr.bf16.mxu0 0
        %333 = vmatpush1.bf16.msra.mxu0 0
        %334 = vmatprep.subr.bf16.mxu0 0
        %335 = vmatpush1.bf16.msra.mxu0 0
        %336 = vmatprep.mubr.bf16.mxu0 0
        %337 = vmatmul.mubr.bf16.gmra.mrb[0].mxu0 %v302
        %v338 = vpop.f32.mrb[0].mxu0
        %v339 = vadd.f32 %v286, %v338
        %v340 = vpop.f32.mrb[0].mxu0
        %v341 = vpop.f32.mrb[0].mxu0
        %v342 = vpop.f32.mrb[0].mxu0
        %343 = vdwg.mxu0
        %v344 = vpack.c.bf16 %v339, %v339
        %vm345 = vcmask 60416
        %346 = vst.msk [vmem:[%s249] sm:$0xf] %vm345, %v344
        %s347 = sand.u32 %s143, 1
        %s348 = scalar_lea.sflag [#allocation3], %s347
        %s349 = sand.u32 %s143, 1
        %s350 = smul.addr %s349, 4
        %s351 = scalar_lea.vmem [#allocation2], %s350
        // Predicated region
        $region33: #{tpu_custom_call.1} parent=31 // pred_check
          %p352 = pneg %p153
        $region34: #{tpu_custom_call.1} parent=31 // pred_check_branch
          %354 = sbr.rel (%p352) target = $region36
        $region35: #{tpu_custom_call.1} parent=31 // pred_region
          %s355 = smul.u32 %s23, 4
          %s356 = sadd.s32 %s355, %s26
          %s358 = ssub.s32 64, 64
          %359 = vsyncadd %s348, %s358
          %s360 = sadd.s32 %s24, %s356
          %s361 = smul.addr %s25, 8
          %s362 = sadd.s32 %s360, %s361
          %s363 = smul.addr %s362, 64
          %s364 = scalar_lea.hbm %s3, %s363
          %s366 = sshll.u32 %s351, 4
          %s367 = int_to_ptr.vmem [resolvable:$true] %s366
          %369 = dma.vmem_to_hbm [thread:$0]  %s367, 64, %s364, %s348
        $region36: #{tpu_custom_call.1} parent=31 // pred_fallthru
          _
      $region32: #{tpu_custom_call.1} parent=5 // pred_fallthru
        _
      %p370 = scmp.le.s32.totalorder 2, %s12
      // Predicated region
      $region37: #{tpu_custom_call.1} parent=5 // pred_check
        %p371 = pneg %p370
      $region38: #{tpu_custom_call.1} parent=5 // pred_check_branch
        %373 = sbr.rel (%p371) target = $region40
      $region39: #{tpu_custom_call.1} parent=5 // pred_region
        %s374 = ssub.s32 %s12, 2
        // Predicated region
        $region41: #{tpu_custom_call.1} parent=39 // pred_check
          %p375 = pneg %p159
        $region42: #{tpu_custom_call.1} parent=39 // pred_check_branch
          %377 = sbr.rel (%p375) target = $region44
        $region43: #{tpu_custom_call.1} parent=39 // pred_region
          %s378 = sand.u32 %s144, 1
          %s379 = scalar_lea.sflag [#allocation3], %s378
          %s380 = sand.u32 %s144, 1
          %s381 = smul.addr %s380, 4
          %s382 = scalar_lea.vmem [#allocation2], %s381
          %383 = dma.done %s379, 64
        $region44: #{tpu_custom_call.1} parent=39 // pred_fallthru
          _
      $region40: #{tpu_custom_call.1} parent=5 // pred_fallthru
        _
    $region6: #{tpu_custom_call.1} parent=1 // loop_footer
      %s16 = sadd.s32 1, %s12
    $region7: #{tpu_custom_call.1} parent=1 // loop_footer_branch
      %11 = sbr.rel target = $region3
    $region8: #{tpu_custom_call.1} parent=1 // loop_exit
      _
    %384 = vsyncpa [#allocation3], 1
    %s385 = scalar_lea.sflag [#allocation3], 1
    %386 = vsyncpa %s385, 1

</llo_original>
